<compile_context>
chip_gen: v6e
topology: v6e:2x2x1
jax: 0.10.0
libtpu: 0.0.40
codegen_flags: <defaults>
</compile_context>

<pallas_src>
import jax
import jax.numpy as jnp
from jax.experimental import pallas as pl
from jax.experimental.pallas import tpu as pltpu


def _tree_sum(terms):
    """Balanced pairwise add tree (shortens the dependent-add chain)."""
    while len(terms) > 1:
        nxt = [terms[i] + terms[i + 1] for i in range(0, len(terms) - 1, 2)]
        if len(terms) % 2:
            nxt.append(terms[-1])
        terms = nxt
    return terms[0]


def _make_lstm_kernel(T, B, D_in, H):
    """Build the kernel with static T/B/D_in/H baked in (full unroll)."""
    G = 4 * H
    ROW_WIH = 0                      # rows [0, D_in)          : w_ih^T  (g cols pre-scaled x2)
    ROW_B = D_in                     # row  D_in               : b_ih+b_hh (g cols pre-scaled x2)
    ROW_WHH = D_in + 1               # rows [D_in+1, D_in+1+H) : w_hh^T  (g cols pre-scaled x2)
    ROW_WLIN = D_in + 1 + H          # row                     : linear weight in cols [0, H)
    ROW_BLIN = D_in + 2 + H          # row                     : linear bias in col 0

    def kernel(p_ref, x_ref, out_ref):
        # p_ref  : (R, 4H) packed parameter slab (single DMA)
        # x_ref  : (T*B, D_in) time-major flattened input
        # out_ref: (B, 1)
        P = p_ref[...]
        x2d = x_ref[...]

        w_ih_t = P[ROW_WIH:ROW_WIH + D_in, :]        # (D_in, 4H)
        b_row = P[ROW_B:ROW_B + 1, :]                # (1, 4H)
        w_hh_t = P[ROW_WHH:ROW_WHH + H, :]           # (H, 4H)
        w_lin = P[ROW_WLIN:ROW_WLIN + 1, 0:H]        # (1, H)
        b_lin = P[ROW_BLIN:ROW_BLIN + 1, 0:1]        # (1, 1)

        # ---- Hoisted input projection for ALL timesteps (off the serial h-chain).
        # D_in is tiny, so VPU broadcast-MACs; no MXU involved anywhere.
        xw = x2d[:, 0:1] * w_ih_t[0:1, :] + b_row    # (T*B, 4H)
        for d in range(1, D_in):
            xw = xw + x2d[:, d:d + 1] * w_ih_t[d:d + 1, :]

        # ---- Hoist the (1,4H)->(B,4H) broadcasts of the recurrent weight rows out of
        #      the unrolled T loop (JAX does not CSE broadcast_in_dim).
        w_hh_bcast = [jnp.broadcast_to(w_hh_t[k:k + 1, :], (B, G)) for k in range(H)]

        h = jnp.zeros((B, H), jnp.float32)
        c = jnp.zeros((B, H), jnp.float32)

        # ---- Fully unrolled recurrence (T small & compile-time known).
        # TODO(synk): for long T switch to lax.fori_loop over T-chunks (unroll~8) carrying (h,c).
        for t in range(T):
            xw_t = xw[t * B:(t + 1) * B, :]          # (B, 4H), static slice
            # H independent lane-broadcast MACs combined by a balanced add tree: the
            # dependent-add chain on the recurrence critical path is O(log H), not O(H).
            prods = [h[:, k:k + 1] * w_hh_bcast[k] for k in range(H)]
            gates = _tree_sum([xw_t] + prods)        # (B, 4H)
            # One fused sigmoid over the packed gates (single EUP push); g-gate columns
            # were pre-scaled by 2, so tanh(z) = 2*sigmoid(2z) - 1.
            s = jax.nn.sigmoid(gates)
            i = s[:, 0 * H:1 * H]
            f = s[:, 1 * H:2 * H]
            g = 2.0 * s[:, 2 * H:3 * H] - 1.0
            o = s[:, 3 * H:4 * H]
            c = f * c + i * g
            h = o * jnp.tanh(c)

        # ---- Final Linear(H, 1) as VPU MACs, bias folded in (no MXU).
        # TODO(synk): for B >= 128 emit a lane-dense (1, B) output instead of (B, 1).
        out = h[:, 0:1] * w_lin[:, 0:1] + b_lin
        for k in range(1, H):
            out = out + h[:, k:k + 1] * w_lin[:, k:k + 1]
        out_ref[...] = out

    return kernel


def _pack_params(params, D_in, H):
    """Pack all parameters into one (8k, 4H) f32 slab (g-gate rows pre-scaled by 2)."""
    G = 4 * H
    scale = jnp.ones((G, 1), jnp.float32).at[2 * H:3 * H].set(2.0)
    w_ih_t = (params["w_ih"] * scale).T                         # (D_in, 4H)
    w_hh_t = (params["w_hh"] * scale).T                         # (H, 4H)
    b = (params["b_ih"] + params["b_hh"]) * scale[:, 0]         # (4H,)
    n_rows = D_in + H + 3
    n_rows_padded = ((n_rows + 7) // 8) * 8                     # pad rows to sublane multiple
    slab = jnp.zeros((n_rows_padded, G), jnp.float32)
    slab = slab.at[0:D_in, :].set(w_ih_t)
    slab = slab.at[D_in, :].set(b)
    slab = slab.at[D_in + 1:D_in + 1 + H, :].set(w_hh_t)
    slab = slab.at[D_in + 1 + H, 0:H].set(params["w_lin"][0])
    slab = slab.at[D_in + 2 + H, 0].set(params["b_lin"][0])
    return slab


def init_params(key, input_dim=1, hidden_dim=3):
    """Deterministic parameter init mirroring LSTMModel.init_weights()."""
    k_ih, k_hh, k_bih, k_bhh, k_lin = jax.random.split(key, 5)
    H = hidden_dim
    # xavier_uniform_ on weight_ih (4H, D_in)
    w_ih = jax.nn.initializers.glorot_uniform()(k_ih, (4 * H, input_dim), jnp.float32)
    # orthogonal_ on weight_hh (4H, H)
    w_hh = jax.nn.initializers.orthogonal()(k_hh, (4 * H, H), jnp.float32)
    # LSTM biases keep PyTorch default init: U(-1/sqrt(H), 1/sqrt(H))
    bound = 1.0 / jnp.sqrt(jnp.float32(H))
    b_ih = jax.random.uniform(k_bih, (4 * H,), jnp.float32, -bound, bound)
    b_hh = jax.random.uniform(k_bhh, (4 * H,), jnp.float32, -bound, bound)
    # xavier_uniform_ on linear weight (1, H); linear bias filled with 0.01
    w_lin = jax.nn.initializers.glorot_uniform()(k_lin, (1, H), jnp.float32)
    b_lin = jnp.full((1,), 0.01, jnp.float32)
    return dict(w_ih=w_ih, w_hh=w_hh, b_ih=b_ih, b_hh=b_hh, w_lin=w_lin, b_lin=b_lin)


def lstm_model_forward(x, params):
    """Pallas equivalent of LSTMModel.forward. x: (B, T, D_in) or (B, D_in)."""
    if x.ndim == 2:                       # matches x.unsqueeze(1) in PyTorch
        x = x[:, None, :]
    x = x.astype(jnp.float32)
    B, T, D_in = x.shape
    H = params["w_hh"].shape[1]

    slab = _pack_params(params, D_in, H)                        # single packed operand

    # Time-major and flattened to 2D.
    # TODO(synk): at large T*B stream the hoisted projection xw (T*B, 4H) or use a
    # lane-dense x layout; at T*B=16 the (T*B, 1) layout is harmless.
    x2d = jnp.transpose(x, (1, 0, 2)).reshape(T * B, D_in)      # (T*B, D_in)

    # TODO(synk): for large B add a "parallel" batch grid axis (sharded across v7x's
    # 2 TensorCores), sizing the batch tile against v7x's 64 MiB VMEM.
    kernel = _make_lstm_kernel(T, B, D_in, H)
    vmem = pl.BlockSpec(memory_space=pltpu.MemorySpace.VMEM)
    out = pl.pallas_call(
        kernel,
        out_shape=jax.ShapeDtypeStruct((B, 1), jnp.float32),
        in_specs=[vmem, vmem],
        out_specs=vmem,
    )(slab, x2d)
    return out


def _reference_forward(x, params):
    """Pure-JAX reference (identical math to PyTorch nn.LSTM + Linear)."""
    if x.ndim == 2:
        x = x[:, None, :]
    B, T, _ = x.shape
    H = params["w_hh"].shape[1]
    w_ih_t = params["w_ih"].T
    w_hh_t = params["w_hh"].T
    b = (params["b_ih"] + params["b_hh"]).reshape(1, 4 * H)
    h = jnp.zeros((B, H), jnp.float32)
    c = jnp.zeros((B, H), jnp.float32)
    for t in range(T):
        gates = x[:, t, :] @ w_ih_t + h @ w_hh_t + b
        i = jax.nn.sigmoid(gates[:, 0 * H:1 * H])
        f = jax.nn.sigmoid(gates[:, 1 * H:2 * H])
        g = jnp.tanh(gates[:, 2 * H:3 * H])
        o = jax.nn.sigmoid(gates[:, 3 * H:4 * H])
        c = f * c + i * g
        h = o * jnp.tanh(c)
    return h @ params["w_lin"].T + params["b_lin"].reshape(1, 1)


if __name__ == "__main__":
    key = jax.random.PRNGKey(0)
    k_param, k_x = jax.random.split(key)

    input_dim, hidden_dim = 1, 3
    B, T = 2, 8
    params = init_params(k_param, input_dim=input_dim, hidden_dim=hidden_dim)
    x = jax.random.normal(k_x, (B, T, input_dim), jnp.float32)

    out = lstm_model_forward(x, params)
    out = jax.block_until_ready(out)

    ref = _reference_forward(x, params)
    assert out.shape == (B, 1), out.shape
    assert jnp.allclose(out, ref, atol=1e-4, rtol=1e-4), (out, ref)

    print("KERNEL_OK")
</pallas_src>

<mosaic_0001>
module attributes {stable_mosaic.version = 11 : i64} {
  func.func @kernel(%arg0: memref<8x12xf32, #tpu.memory_space<vmem>>, %arg1: memref<16x1xf32, #tpu.memory_space<vmem>>, %arg2: memref<2x1xf32, #tpu.memory_space<vmem>>) attributes {dimension_semantics = [], scalar_prefetch = 0 : i64, scratch_operands = 0 : i64, tpu.core_type = #tpu.core_type<tc>} {
    %c0 = arith.constant 0 : index
    %c0_0 = arith.constant 0 : index
    %0 = vector.load %arg0[%c0, %c0_0] : memref<8x12xf32, #tpu.memory_space<vmem>>, vector<8x12xf32>
    %c0_1 = arith.constant 0 : index
    %c0_2 = arith.constant 0 : index
    %1 = vector.load %arg1[%c0_1, %c0_2] : memref<16x1xf32, #tpu.memory_space<vmem>>, vector<16x1xf32>
    %2 = vector.extract_strided_slice %0 {offsets = [0, 0], sizes = [1, 12], strides = [1, 1]} : vector<8x12xf32> to vector<1x12xf32>
    %3 = vector.extract_strided_slice %0 {offsets = [1, 0], sizes = [1, 12], strides = [1, 1]} : vector<8x12xf32> to vector<1x12xf32>
    %4 = vector.extract_strided_slice %0 {offsets = [2, 0], sizes = [3, 12], strides = [1, 1]} : vector<8x12xf32> to vector<3x12xf32>
    %5 = vector.extract_strided_slice %0 {offsets = [5, 0], sizes = [1, 3], strides = [1, 1]} : vector<8x12xf32> to vector<1x3xf32>
    %6 = vector.extract_strided_slice %0 {offsets = [6, 0], sizes = [1, 1], strides = [1, 1]} : vector<8x12xf32> to vector<1x1xf32>
    %7 = vector.broadcast %1 : vector<16x1xf32> to vector<16x12xf32>
    %8 = vector.broadcast %2 : vector<1x12xf32> to vector<16x12xf32>
    %9 = arith.mulf %7, %8 : vector<16x12xf32>
    %10 = vector.broadcast %3 : vector<1x12xf32> to vector<16x12xf32>
    %11 = arith.addf %9, %10 : vector<16x12xf32>
    %12 = vector.extract_strided_slice %4 {offsets = [0, 0], sizes = [1, 12], strides = [1, 1]} : vector<3x12xf32> to vector<1x12xf32>
    %13 = vector.shape_cast %12 : vector<1x12xf32> to vector<1x12xf32>
    %14 = vector.broadcast %13 : vector<1x12xf32> to vector<2x12xf32>
    %15 = vector.extract_strided_slice %4 {offsets = [1, 0], sizes = [1, 12], strides = [1, 1]} : vector<3x12xf32> to vector<1x12xf32>
    %16 = vector.shape_cast %15 : vector<1x12xf32> to vector<1x12xf32>
    %17 = vector.broadcast %16 : vector<1x12xf32> to vector<2x12xf32>
    %18 = vector.extract_strided_slice %4 {offsets = [2, 0], sizes = [1, 12], strides = [1, 1]} : vector<3x12xf32> to vector<1x12xf32>
    %19 = vector.shape_cast %18 : vector<1x12xf32> to vector<1x12xf32>
    %20 = vector.broadcast %19 : vector<1x12xf32> to vector<2x12xf32>
    %cst = arith.constant 0.000000e+00 : f32
    %21 = vector.broadcast %cst : f32 to vector<2x3xf32>
    %cst_3 = arith.constant 0.000000e+00 : f32
    %22 = vector.broadcast %cst_3 : f32 to vector<2x3xf32>
    %23 = vector.extract_strided_slice %11 {offsets = [0, 0], sizes = [2, 12], strides = [1, 1]} : vector<16x12xf32> to vector<2x12xf32>
    %24 = vector.extract_strided_slice %21 {offsets = [0, 0], sizes = [2, 1], strides = [1, 1]} : vector<2x3xf32> to vector<2x1xf32>
    %25 = vector.broadcast %24 : vector<2x1xf32> to vector<2x12xf32>
    %26 = arith.mulf %25, %14 : vector<2x12xf32>
    %27 = vector.extract_strided_slice %21 {offsets = [0, 1], sizes = [2, 1], strides = [1, 1]} : vector<2x3xf32> to vector<2x1xf32>
    %28 = vector.broadcast %27 : vector<2x1xf32> to vector<2x12xf32>
    %29 = arith.mulf %28, %17 : vector<2x12xf32>
    %30 = vector.extract_strided_slice %21 {offsets = [0, 2], sizes = [2, 1], strides = [1, 1]} : vector<2x3xf32> to vector<2x1xf32>
    %31 = vector.broadcast %30 : vector<2x1xf32> to vector<2x12xf32>
    %32 = arith.mulf %31, %20 : vector<2x12xf32>
    %33 = arith.addf %23, %26 : vector<2x12xf32>
    %34 = arith.addf %29, %32 : vector<2x12xf32>
    %35 = arith.addf %33, %34 : vector<2x12xf32>
    %36 = arith.negf %35 : vector<2x12xf32>
    %37 = math.exp %36 : vector<2x12xf32>
    %cst_4 = arith.constant 1.000000e+00 : f32
    %38 = vector.broadcast %cst_4 : f32 to vector<2x12xf32>
    %39 = arith.addf %38, %37 : vector<2x12xf32>
    %40 = arith.divf %38, %39 : vector<2x12xf32>
    %41 = vector.extract_strided_slice %40 {offsets = [0, 0], sizes = [2, 3], strides = [1, 1]} : vector<2x12xf32> to vector<2x3xf32>
    %42 = vector.extract_strided_slice %40 {offsets = [0, 3], sizes = [2, 3], strides = [1, 1]} : vector<2x12xf32> to vector<2x3xf32>
    %43 = vector.extract_strided_slice %40 {offsets = [0, 6], sizes = [2, 3], strides = [1, 1]} : vector<2x12xf32> to vector<2x3xf32>
    %cst_5 = arith.constant 2.000000e+00 : f32
    %44 = vector.broadcast %cst_5 : f32 to vector<2x3xf32>
    %45 = arith.mulf %44, %43 : vector<2x3xf32>
    %cst_6 = arith.constant 1.000000e+00 : f32
    %46 = vector.broadcast %cst_6 : f32 to vector<2x3xf32>
    %47 = arith.subf %45, %46 : vector<2x3xf32>
    %48 = vector.extract_strided_slice %40 {offsets = [0, 9], sizes = [2, 3], strides = [1, 1]} : vector<2x12xf32> to vector<2x3xf32>
    %49 = arith.mulf %42, %22 : vector<2x3xf32>
    %50 = arith.mulf %41, %47 : vector<2x3xf32>
    %51 = arith.addf %49, %50 : vector<2x3xf32>
    %52 = math.tanh %51 : vector<2x3xf32>
    %53 = arith.mulf %48, %52 : vector<2x3xf32>
    %54 = vector.extract_strided_slice %11 {offsets = [2, 0], sizes = [2, 12], strides = [1, 1]} : vector<16x12xf32> to vector<2x12xf32>
    %55 = vector.extract_strided_slice %53 {offsets = [0, 0], sizes = [2, 1], strides = [1, 1]} : vector<2x3xf32> to vector<2x1xf32>
    %56 = vector.broadcast %55 : vector<2x1xf32> to vector<2x12xf32>
    %57 = arith.mulf %56, %14 : vector<2x12xf32>
    %58 = vector.extract_strided_slice %53 {offsets = [0, 1], sizes = [2, 1], strides = [1, 1]} : vector<2x3xf32> to vector<2x1xf32>
    %59 = vector.broadcast %58 : vector<2x1xf32> to vector<2x12xf32>
    %60 = arith.mulf %59, %17 : vector<2x12xf32>
    %61 = vector.extract_strided_slice %53 {offsets = [0, 2], sizes = [2, 1], strides = [1, 1]} : vector<2x3xf32> to vector<2x1xf32>
    %62 = vector.broadcast %61 : vector<2x1xf32> to vector<2x12xf32>
    %63 = arith.mulf %62, %20 : vector<2x12xf32>
    %64 = arith.addf %54, %57 : vector<2x12xf32>
    %65 = arith.addf %60, %63 : vector<2x12xf32>
    %66 = arith.addf %64, %65 : vector<2x12xf32>
    %67 = arith.negf %66 : vector<2x12xf32>
    %68 = math.exp %67 : vector<2x12xf32>
    %cst_7 = arith.constant 1.000000e+00 : f32
    %69 = vector.broadcast %cst_7 : f32 to vector<2x12xf32>
    %70 = arith.addf %69, %68 : vector<2x12xf32>
    %71 = arith.divf %69, %70 : vector<2x12xf32>
    %72 = vector.extract_strided_slice %71 {offsets = [0, 0], sizes = [2, 3], strides = [1, 1]} : vector<2x12xf32> to vector<2x3xf32>
    %73 = vector.extract_strided_slice %71 {offsets = [0, 3], sizes = [2, 3], strides = [1, 1]} : vector<2x12xf32> to vector<2x3xf32>
    %74 = vector.extract_strided_slice %71 {offsets = [0, 6], sizes = [2, 3], strides = [1, 1]} : vector<2x12xf32> to vector<2x3xf32>
    %cst_8 = arith.constant 2.000000e+00 : f32
    %75 = vector.broadcast %cst_8 : f32 to vector<2x3xf32>
    %76 = arith.mulf %75, %74 : vector<2x3xf32>
    %cst_9 = arith.constant 1.000000e+00 : f32
    %77 = vector.broadcast %cst_9 : f32 to vector<2x3xf32>
    %78 = arith.subf %76, %77 : vector<2x3xf32>
    %79 = vector.extract_strided_slice %71 {offsets = [0, 9], sizes = [2, 3], strides = [1, 1]} : vector<2x12xf32> to vector<2x3xf32>
    %80 = arith.mulf %73, %51 : vector<2x3xf32>
    %81 = arith.mulf %72, %78 : vector<2x3xf32>
    %82 = arith.addf %80, %81 : vector<2x3xf32>
    %83 = math.tanh %82 : vector<2x3xf32>
    %84 = arith.mulf %79, %83 : vector<2x3xf32>
    %85 = vector.extract_strided_slice %11 {offsets = [4, 0], sizes = [2, 12], strides = [1, 1]} : vector<16x12xf32> to vector<2x12xf32>
    %86 = vector.extract_strided_slice %84 {offsets = [0, 0], sizes = [2, 1], strides = [1, 1]} : vector<2x3xf32> to vector<2x1xf32>
    %87 = vector.broadcast %86 : vector<2x1xf32> to vector<2x12xf32>
    %88 = arith.mulf %87, %14 : vector<2x12xf32>
    %89 = vector.extract_strided_slice %84 {offsets = [0, 1], sizes = [2, 1], strides = [1, 1]} : vector<2x3xf32> to vector<2x1xf32>
    %90 = vector.broadcast %89 : vector<2x1xf32> to vector<2x12xf32>
    %91 = arith.mulf %90, %17 : vector<2x12xf32>
    %92 = vector.extract_strided_slice %84 {offsets = [0, 2], sizes = [2, 1], strides = [1, 1]} : vector<2x3xf32> to vector<2x1xf32>
    %93 = vector.broadcast %92 : vector<2x1xf32> to vector<2x12xf32>
    %94 = arith.mulf %93, %20 : vector<2x12xf32>
    %95 = arith.addf %85, %88 : vector<2x12xf32>
    %96 = arith.addf %91, %94 : vector<2x12xf32>
    %97 = arith.addf %95, %96 : vector<2x12xf32>
    %98 = arith.negf %97 : vector<2x12xf32>
    %99 = math.exp %98 : vector<2x12xf32>
    %cst_10 = arith.constant 1.000000e+00 : f32
    %100 = vector.broadcast %cst_10 : f32 to vector<2x12xf32>
    %101 = arith.addf %100, %99 : vector<2x12xf32>
    %102 = arith.divf %100, %101 : vector<2x12xf32>
    %103 = vector.extract_strided_slice %102 {offsets = [0, 0], sizes = [2, 3], strides = [1, 1]} : vector<2x12xf32> to vector<2x3xf32>
    %104 = vector.extract_strided_slice %102 {offsets = [0, 3], sizes = [2, 3], strides = [1, 1]} : vector<2x12xf32> to vector<2x3xf32>
    %105 = vector.extract_strided_slice %102 {offsets = [0, 6], sizes = [2, 3], strides = [1, 1]} : vector<2x12xf32> to vector<2x3xf32>
    %cst_11 = arith.constant 2.000000e+00 : f32
    %106 = vector.broadcast %cst_11 : f32 to vector<2x3xf32>
    %107 = arith.mulf %106, %105 : vector<2x3xf32>
    %cst_12 = arith.constant 1.000000e+00 : f32
    %108 = vector.broadcast %cst_12 : f32 to vector<2x3xf32>
    %109 = arith.subf %107, %108 : vector<2x3xf32>
    %110 = vector.extract_strided_slice %102 {offsets = [0, 9], sizes = [2, 3], strides = [1, 1]} : vector<2x12xf32> to vector<2x3xf32>
    %111 = arith.mulf %104, %82 : vector<2x3xf32>
    %112 = arith.mulf %103, %109 : vector<2x3xf32>
    %113 = arith.addf %111, %112 : vector<2x3xf32>
    %114 = math.tanh %113 : vector<2x3xf32>
    %115 = arith.mulf %110, %114 : vector<2x3xf32>
    %116 = vector.extract_strided_slice %11 {offsets = [6, 0], sizes = [2, 12], strides = [1, 1]} : vector<16x12xf32> to vector<2x12xf32>
    %117 = vector.extract_strided_slice %115 {offsets = [0, 0], sizes = [2, 1], strides = [1, 1]} : vector<2x3xf32> to vector<2x1xf32>
    %118 = vector.broadcast %117 : vector<2x1xf32> to vector<2x12xf32>
    %119 = arith.mulf %118, %14 : vector<2x12xf32>
    %120 = vector.extract_strided_slice %115 {offsets = [0, 1], sizes = [2, 1], strides = [1, 1]} : vector<2x3xf32> to vector<2x1xf32>
    %121 = vector.broadcast %120 : vector<2x1xf32> to vector<2x12xf32>
    %122 = arith.mulf %121, %17 : vector<2x12xf32>
    %123 = vector.extract_strided_slice %115 {offsets = [0, 2], sizes = [2, 1], strides = [1, 1]} : vector<2x3xf32> to vector<2x1xf32>
    %124 = vector.broadcast %123 : vector<2x1xf32> to vector<2x12xf32>
    %125 = arith.mulf %124, %20 : vector<2x12xf32>
    %126 = arith.addf %116, %119 : vector<2x12xf32>
    %127 = arith.addf %122, %125 : vector<2x12xf32>
    %128 = arith.addf %126, %127 : vector<2x12xf32>
    %129 = arith.negf %128 : vector<2x12xf32>
    %130 = math.exp %129 : vector<2x12xf32>
    %cst_13 = arith.constant 1.000000e+00 : f32
    %131 = vector.broadcast %cst_13 : f32 to vector<2x12xf32>
    %132 = arith.addf %131, %130 : vector<2x12xf32>
    %133 = arith.divf %131, %132 : vector<2x12xf32>
    %134 = vector.extract_strided_slice %133 {offsets = [0, 0], sizes = [2, 3], strides = [1, 1]} : vector<2x12xf32> to vector<2x3xf32>
    %135 = vector.extract_strided_slice %133 {offsets = [0, 3], sizes = [2, 3], strides = [1, 1]} : vector<2x12xf32> to vector<2x3xf32>
    %136 = vector.extract_strided_slice %133 {offsets = [0, 6], sizes = [2, 3], strides = [1, 1]} : vector<2x12xf32> to vector<2x3xf32>
    %cst_14 = arith.constant 2.000000e+00 : f32
    %137 = vector.broadcast %cst_14 : f32 to vector<2x3xf32>
    %138 = arith.mulf %137, %136 : vector<2x3xf32>
    %cst_15 = arith.constant 1.000000e+00 : f32
    %139 = vector.broadcast %cst_15 : f32 to vector<2x3xf32>
    %140 = arith.subf %138, %139 : vector<2x3xf32>
    %141 = vector.extract_strided_slice %133 {offsets = [0, 9], sizes = [2, 3], strides = [1, 1]} : vector<2x12xf32> to vector<2x3xf32>
    %142 = arith.mulf %135, %113 : vector<2x3xf32>
    %143 = arith.mulf %134, %140 : vector<2x3xf32>
    %144 = arith.addf %142, %143 : vector<2x3xf32>
    %145 = math.tanh %144 : vector<2x3xf32>
    %146 = arith.mulf %141, %145 : vector<2x3xf32>
    %147 = vector.extract_strided_slice %11 {offsets = [8, 0], sizes = [2, 12], strides = [1, 1]} : vector<16x12xf32> to vector<2x12xf32>
    %148 = vector.extract_strided_slice %146 {offsets = [0, 0], sizes = [2, 1], strides = [1, 1]} : vector<2x3xf32> to vector<2x1xf32>
    %149 = vector.broadcast %148 : vector<2x1xf32> to vector<2x12xf32>
    %150 = arith.mulf %149, %14 : vector<2x12xf32>
    %151 = vector.extract_strided_slice %146 {offsets = [0, 1], sizes = [2, 1], strides = [1, 1]} : vector<2x3xf32> to vector<2x1xf32>
    %152 = vector.broadcast %151 : vector<2x1xf32> to vector<2x12xf32>
    %153 = arith.mulf %152, %17 : vector<2x12xf32>
    %154 = vector.extract_strided_slice %146 {offsets = [0, 2], sizes = [2, 1], strides = [1, 1]} : vector<2x3xf32> to vector<2x1xf32>
    %155 = vector.broadcast %154 : vector<2x1xf32> to vector<2x12xf32>
    %156 = arith.mulf %155, %20 : vector<2x12xf32>
    %157 = arith.addf %147, %150 : vector<2x12xf32>
    %158 = arith.addf %153, %156 : vector<2x12xf32>
    %159 = arith.addf %157, %158 : vector<2x12xf32>
    %160 = arith.negf %159 : vector<2x12xf32>
    %161 = math.exp %160 : vector<2x12xf32>
    %cst_16 = arith.constant 1.000000e+00 : f32
    %162 = vector.broadcast %cst_16 : f32 to vector<2x12xf32>
    %163 = arith.addf %162, %161 : vector<2x12xf32>
    %164 = arith.divf %162, %163 : vector<2x12xf32>
    %165 = vector.extract_strided_slice %164 {offsets = [0, 0], sizes = [2, 3], strides = [1, 1]} : vector<2x12xf32> to vector<2x3xf32>
    %166 = vector.extract_strided_slice %164 {offsets = [0, 3], sizes = [2, 3], strides = [1, 1]} : vector<2x12xf32> to vector<2x3xf32>
    %167 = vector.extract_strided_slice %164 {offsets = [0, 6], sizes = [2, 3], strides = [1, 1]} : vector<2x12xf32> to vector<2x3xf32>
    %cst_17 = arith.constant 2.000000e+00 : f32
    %168 = vector.broadcast %cst_17 : f32 to vector<2x3xf32>
    %169 = arith.mulf %168, %167 : vector<2x3xf32>
    %cst_18 = arith.constant 1.000000e+00 : f32
    %170 = vector.broadcast %cst_18 : f32 to vector<2x3xf32>
    %171 = arith.subf %169, %170 : vector<2x3xf32>
    %172 = vector.extract_strided_slice %164 {offsets = [0, 9], sizes = [2, 3], strides = [1, 1]} : vector<2x12xf32> to vector<2x3xf32>
    %173 = arith.mulf %166, %144 : vector<2x3xf32>
    %174 = arith.mulf %165, %171 : vector<2x3xf32>
    %175 = arith.addf %173, %174 : vector<2x3xf32>
    %176 = math.tanh %175 : vector<2x3xf32>
    %177 = arith.mulf %172, %176 : vector<2x3xf32>
    %178 = vector.extract_strided_slice %11 {offsets = [10, 0], sizes = [2, 12], strides = [1, 1]} : vector<16x12xf32> to vector<2x12xf32>
    %179 = vector.extract_strided_slice %177 {offsets = [0, 0], sizes = [2, 1], strides = [1, 1]} : vector<2x3xf32> to vector<2x1xf32>
    %180 = vector.broadcast %179 : vector<2x1xf32> to vector<2x12xf32>
    %181 = arith.mulf %180, %14 : vector<2x12xf32>
    %182 = vector.extract_strided_slice %177 {offsets = [0, 1], sizes = [2, 1], strides = [1, 1]} : vector<2x3xf32> to vector<2x1xf32>
    %183 = vector.broadcast %182 : vector<2x1xf32> to vector<2x12xf32>
    %184 = arith.mulf %183, %17 : vector<2x12xf32>
    %185 = vector.extract_strided_slice %177 {offsets = [0, 2], sizes = [2, 1], strides = [1, 1]} : vector<2x3xf32> to vector<2x1xf32>
    %186 = vector.broadcast %185 : vector<2x1xf32> to vector<2x12xf32>
    %187 = arith.mulf %186, %20 : vector<2x12xf32>
    %188 = arith.addf %178, %181 : vector<2x12xf32>
    %189 = arith.addf %184, %187 : vector<2x12xf32>
    %190 = arith.addf %188, %189 : vector<2x12xf32>
    %191 = arith.negf %190 : vector<2x12xf32>
    %192 = math.exp %191 : vector<2x12xf32>
    %cst_19 = arith.constant 1.000000e+00 : f32
    %193 = vector.broadcast %cst_19 : f32 to vector<2x12xf32>
    %194 = arith.addf %193, %192 : vector<2x12xf32>
    %195 = arith.divf %193, %194 : vector<2x12xf32>
    %196 = vector.extract_strided_slice %195 {offsets = [0, 0], sizes = [2, 3], strides = [1, 1]} : vector<2x12xf32> to vector<2x3xf32>
    %197 = vector.extract_strided_slice %195 {offsets = [0, 3], sizes = [2, 3], strides = [1, 1]} : vector<2x12xf32> to vector<2x3xf32>
    %198 = vector.extract_strided_slice %195 {offsets = [0, 6], sizes = [2, 3], strides = [1, 1]} : vector<2x12xf32> to vector<2x3xf32>
    %cst_20 = arith.constant 2.000000e+00 : f32
    %199 = vector.broadcast %cst_20 : f32 to vector<2x3xf32>
    %200 = arith.mulf %199, %198 : vector<2x3xf32>
    %cst_21 = arith.constant 1.000000e+00 : f32
    %201 = vector.broadcast %cst_21 : f32 to vector<2x3xf32>
    %202 = arith.subf %200, %201 : vector<2x3xf32>
    %203 = vector.extract_strided_slice %195 {offsets = [0, 9], sizes = [2, 3], strides = [1, 1]} : vector<2x12xf32> to vector<2x3xf32>
    %204 = arith.mulf %197, %175 : vector<2x3xf32>
    %205 = arith.mulf %196, %202 : vector<2x3xf32>
    %206 = arith.addf %204, %205 : vector<2x3xf32>
    %207 = math.tanh %206 : vector<2x3xf32>
    %208 = arith.mulf %203, %207 : vector<2x3xf32>
    %209 = vector.extract_strided_slice %11 {offsets = [12, 0], sizes = [2, 12], strides = [1, 1]} : vector<16x12xf32> to vector<2x12xf32>
    %210 = vector.extract_strided_slice %208 {offsets = [0, 0], sizes = [2, 1], strides = [1, 1]} : vector<2x3xf32> to vector<2x1xf32>
    %211 = vector.broadcast %210 : vector<2x1xf32> to vector<2x12xf32>
    %212 = arith.mulf %211, %14 : vector<2x12xf32>
    %213 = vector.extract_strided_slice %208 {offsets = [0, 1], sizes = [2, 1], strides = [1, 1]} : vector<2x3xf32> to vector<2x1xf32>
    %214 = vector.broadcast %213 : vector<2x1xf32> to vector<2x12xf32>
    %215 = arith.mulf %214, %17 : vector<2x12xf32>
    %216 = vector.extract_strided_slice %208 {offsets = [0, 2], sizes = [2, 1], strides = [1, 1]} : vector<2x3xf32> to vector<2x1xf32>
    %217 = vector.broadcast %216 : vector<2x1xf32> to vector<2x12xf32>
    %218 = arith.mulf %217, %20 : vector<2x12xf32>
    %219 = arith.addf %209, %212 : vector<2x12xf32>
    %220 = arith.addf %215, %218 : vector<2x12xf32>
    %221 = arith.addf %219, %220 : vector<2x12xf32>
    %222 = arith.negf %221 : vector<2x12xf32>
    %223 = math.exp %222 : vector<2x12xf32>
    %cst_22 = arith.constant 1.000000e+00 : f32
    %224 = vector.broadcast %cst_22 : f32 to vector<2x12xf32>
    %225 = arith.addf %224, %223 : vector<2x12xf32>
    %226 = arith.divf %224, %225 : vector<2x12xf32>
    %227 = vector.extract_strided_slice %226 {offsets = [0, 0], sizes = [2, 3], strides = [1, 1]} : vector<2x12xf32> to vector<2x3xf32>
    %228 = vector.extract_strided_slice %226 {offsets = [0, 3], sizes = [2, 3], strides = [1, 1]} : vector<2x12xf32> to vector<2x3xf32>
    %229 = vector.extract_strided_slice %226 {offsets = [0, 6], sizes = [2, 3], strides = [1, 1]} : vector<2x12xf32> to vector<2x3xf32>
    %cst_23 = arith.constant 2.000000e+00 : f32
    %230 = vector.broadcast %cst_23 : f32 to vector<2x3xf32>
    %231 = arith.mulf %230, %229 : vector<2x3xf32>
    %cst_24 = arith.constant 1.000000e+00 : f32
    %232 = vector.broadcast %cst_24 : f32 to vector<2x3xf32>
    %233 = arith.subf %231, %232 : vector<2x3xf32>
    %234 = vector.extract_strided_slice %226 {offsets = [0, 9], sizes = [2, 3], strides = [1, 1]} : vector<2x12xf32> to vector<2x3xf32>
    %235 = arith.mulf %228, %206 : vector<2x3xf32>
    %236 = arith.mulf %227, %233 : vector<2x3xf32>
    %237 = arith.addf %235, %236 : vector<2x3xf32>
    %238 = math.tanh %237 : vector<2x3xf32>
    %239 = arith.mulf %234, %238 : vector<2x3xf32>
    %240 = vector.extract_strided_slice %11 {offsets = [14, 0], sizes = [2, 12], strides = [1, 1]} : vector<16x12xf32> to vector<2x12xf32>
    %241 = vector.extract_strided_slice %239 {offsets = [0, 0], sizes = [2, 1], strides = [1, 1]} : vector<2x3xf32> to vector<2x1xf32>
    %242 = vector.broadcast %241 : vector<2x1xf32> to vector<2x12xf32>
    %243 = arith.mulf %242, %14 : vector<2x12xf32>
    %244 = vector.extract_strided_slice %239 {offsets = [0, 1], sizes = [2, 1], strides = [1, 1]} : vector<2x3xf32> to vector<2x1xf32>
    %245 = vector.broadcast %244 : vector<2x1xf32> to vector<2x12xf32>
    %246 = arith.mulf %245, %17 : vector<2x12xf32>
    %247 = vector.extract_strided_slice %239 {offsets = [0, 2], sizes = [2, 1], strides = [1, 1]} : vector<2x3xf32> to vector<2x1xf32>
    %248 = vector.broadcast %247 : vector<2x1xf32> to vector<2x12xf32>
    %249 = arith.mulf %248, %20 : vector<2x12xf32>
    %250 = arith.addf %240, %243 : vector<2x12xf32>
    %251 = arith.addf %246, %249 : vector<2x12xf32>
    %252 = arith.addf %250, %251 : vector<2x12xf32>
    %253 = arith.negf %252 : vector<2x12xf32>
    %254 = math.exp %253 : vector<2x12xf32>
    %cst_25 = arith.constant 1.000000e+00 : f32
    %255 = vector.broadcast %cst_25 : f32 to vector<2x12xf32>
    %256 = arith.addf %255, %254 : vector<2x12xf32>
    %257 = arith.divf %255, %256 : vector<2x12xf32>
    %258 = vector.extract_strided_slice %257 {offsets = [0, 0], sizes = [2, 3], strides = [1, 1]} : vector<2x12xf32> to vector<2x3xf32>
    %259 = vector.extract_strided_slice %257 {offsets = [0, 3], sizes = [2, 3], strides = [1, 1]} : vector<2x12xf32> to vector<2x3xf32>
    %260 = vector.extract_strided_slice %257 {offsets = [0, 6], sizes = [2, 3], strides = [1, 1]} : vector<2x12xf32> to vector<2x3xf32>
    %cst_26 = arith.constant 2.000000e+00 : f32
    %261 = vector.broadcast %cst_26 : f32 to vector<2x3xf32>
    %262 = arith.mulf %261, %260 : vector<2x3xf32>
    %cst_27 = arith.constant 1.000000e+00 : f32
    %263 = vector.broadcast %cst_27 : f32 to vector<2x3xf32>
    %264 = arith.subf %262, %263 : vector<2x3xf32>
    %265 = vector.extract_strided_slice %257 {offsets = [0, 9], sizes = [2, 3], strides = [1, 1]} : vector<2x12xf32> to vector<2x3xf32>
    %266 = arith.mulf %259, %237 : vector<2x3xf32>
    %267 = arith.mulf %258, %264 : vector<2x3xf32>
    %268 = arith.addf %266, %267 : vector<2x3xf32>
    %269 = math.tanh %268 : vector<2x3xf32>
    %270 = arith.mulf %265, %269 : vector<2x3xf32>
    %271 = vector.extract_strided_slice %270 {offsets = [0, 0], sizes = [2, 1], strides = [1, 1]} : vector<2x3xf32> to vector<2x1xf32>
    %272 = vector.extract_strided_slice %5 {offsets = [0, 0], sizes = [1, 1], strides = [1, 1]} : vector<1x3xf32> to vector<1x1xf32>
    %273 = vector.broadcast %272 : vector<1x1xf32> to vector<2x1xf32>
    %274 = arith.mulf %271, %273 : vector<2x1xf32>
    %275 = vector.broadcast %6 : vector<1x1xf32> to vector<2x1xf32>
    %276 = arith.addf %274, %275 : vector<2x1xf32>
    %277 = vector.extract_strided_slice %270 {offsets = [0, 1], sizes = [2, 1], strides = [1, 1]} : vector<2x3xf32> to vector<2x1xf32>
    %278 = vector.extract_strided_slice %5 {offsets = [0, 1], sizes = [1, 1], strides = [1, 1]} : vector<1x3xf32> to vector<1x1xf32>
    %279 = vector.broadcast %278 : vector<1x1xf32> to vector<2x1xf32>
    %280 = arith.mulf %277, %279 : vector<2x1xf32>
    %281 = arith.addf %276, %280 : vector<2x1xf32>
    %282 = vector.extract_strided_slice %270 {offsets = [0, 2], sizes = [2, 1], strides = [1, 1]} : vector<2x3xf32> to vector<2x1xf32>
    %283 = vector.extract_strided_slice %5 {offsets = [0, 2], sizes = [1, 1], strides = [1, 1]} : vector<1x3xf32> to vector<1x1xf32>
    %284 = vector.broadcast %283 : vector<1x1xf32> to vector<2x1xf32>
    %285 = arith.mulf %282, %284 : vector<2x1xf32>
    %286 = arith.addf %281, %285 : vector<2x1xf32>
    %c0_28 = arith.constant 0 : index
    %c0_29 = arith.constant 0 : index
    %287 = vector.load %arg2[%c0_28, %c0_29] : memref<2x1xf32, #tpu.memory_space<vmem>>, vector<2x1xf32>
    tpu.vector_store %arg2[%c0_28, %c0_29], %286 {strides = array<i32>} : memref<2x1xf32, #tpu.memory_space<vmem>>, vector<2x1xf32>,
    return
  }
}

</mosaic_0001>

<llo_original>
// kernel: tpu_custom_call.1
$region0: #{tpu_custom_call.1}
  #allocation0 [shape = 'u32[]', space=smem, size = 0x4, offset = 0x4, fixed_abs, tag = 'smem constant byte address 0x4 - core index']
  #allocation1 [shape = 'u32[144,128]{1,0:T(1,128)}', space=vmem, size = 0x12000, scoped, tag = 'internal scratch']
  %s0 = inlined_call_operand.vmem [shape: f32[8,12], index: 0, kind: input, shape index: {}]
  %s1 = inlined_call_operand.vmem [shape: f32[16,1], index: 1, kind: input, shape index: {}]
  %s2 = inlined_call_operand.vmem [shape: f32[2,1], index: 2, kind: output, shape index: {}]
  %s3 = sld [smem:[#allocation0]]
  $region18: #{tpu_custom_call.1} parent=0
    _
  %s5 = ssub.s32 1, %s3
  %s6 = scalar_select 0, %s5, %s3
  // Predicated region
  $region2: #{tpu_custom_call.1} parent=0 // pred_check
    _
  $region3: #{tpu_custom_call.1} parent=0 // pred_check_branch
    %8 = sbr.rel (0) target = $region5
  $region4: #{tpu_custom_call.1} parent=0 // pred_region
    _
  $region5: #{tpu_custom_call.1} parent=0 // pred_fallthru
    _
  // Predicated region
  $region6: #{tpu_custom_call.1} parent=0 // pred_check
    _
  $region7: #{tpu_custom_call.1} parent=0 // pred_check_branch
    %10 = sbr.rel (0) target = $region9
  $region8: #{tpu_custom_call.1} parent=0 // pred_region
    _
  $region9: #{tpu_custom_call.1} parent=0 // pred_fallthru
    _
  %v11 = vld [vmem:[%s0] sm:$0xff]
  %v12 = vld [vmem:[%s1] sm:$0xff]
  %v13 = vld [vmem:[%s1 + $0x8] sm:$0xff]
  %15 = vset.pattern.permute.xlu0 0
  %16 = vperm.xlu0 %15, %v12
  %v17 = vpop.permute.xlu0 %16
  %20 = vset.pattern.permute.xlu0 0
  %21 = vperm.xlu0 %20, %v13
  %v22 = vpop.permute.xlu0 %21
  %v24 = vlaneseq
  %v25 = vshrl.u32 %v24, 7
  %v26 = vsub.s32 0, %v25
  %v27 = vrot.slane %v11, %v26
  %v28 = vmul.f32 %v17, %v27
  %v29 = vmul.f32 %v22, %v27
  %v30 = vlaneseq
  %v31 = vshrl.u32 %v30, 7
  %v32 = vsub.s32 1, %v31
  %v33 = vrot.slane %v11, %v32
  %v34 = vadd.f32 %v28, %v33
  %v35 = vadd.f32 %v29, %v33
  %v36 = vlaneseq
  %v37 = vshrl.u32 %v36, 7
  %v38 = vsub.s32 2, %v37
  %v39 = vrot.slane %v11, %v38
  %v40 = vlaneseq
  %v41 = vshrl.u32 %v40, 7
  %v42 = vsub.s32 3, %v41
  %v43 = vrot.slane %v11, %v42
  %v44 = vlaneseq
  %v45 = vshrl.u32 %v44, 7
  %v46 = vsub.s32 4, %v45
  %v47 = vrot.slane %v11, %v46
  %v48 = vmul.f32 %v39, 0.0
  %v49 = vmul.f32 %v43, 0.0
  %v50 = vmul.f32 %v47, 0.0
  %v51 = vadd.f32 %v34, %v48
  %v52 = vadd.f32 %v49, %v50
  %v53 = vadd.f32 %v51, %v52
  %v54 = vxor.u32 %v53, 2147483648
  %v55 = vmul.f32 %v54, 1.442695
  %v56 = vpow.pop %v55
  %v57 = vadd.f32 %v56, 1.0
  %v58 = vrcp.pop %v57
  %v59 = vmul.f32 1.0, %v58
  %v60 = vmul.f32 %v59, 2.0
  %v61 = vsub.f32 %v60, 1.0
  %v62 = vmul.f32 %v59, 0.0
  %64 = vrot.lane.b32.xlu0 %v61, 122
  %v65 = vpop.permute.xlu0 %64
  %v67 = vmul.f32 %v59, %v65
  %69 = vrot.lane.b32.xlu0 %v67, 3
  %v70 = vpop.permute.xlu0 %69
  %v72 = vadd.f32 %v62, %v70
  %v73 = vtanh.pop %v72
  %75 = vrot.lane.b32.xlu0 %v73, 6
  %v76 = vpop.permute.xlu0 %75
  %v78 = vmul.f32 %v59, %v76
  %80 = vset.pattern.permute.xlu0 9
  %81 = vperm.xlu0 %80, %v78
  %v82 = vpop.permute.xlu0 %81
  %v84 = vmul.f32 %v82, %v39
  %85 = vset.pattern.permute.xlu0 10
  %86 = vperm.xlu0 %85, %v78
  %v87 = vpop.permute.xlu0 %86
  %v89 = vmul.f32 %v87, %v43
  %90 = vset.pattern.permute.xlu0 11
  %91 = vperm.xlu0 %90, %v78
  %v92 = vpop.permute.xlu0 %91
  %v94 = vmul.f32 %v92, %v47
  %v96 = vrot.slane %v84, 6
  %v98 = vadd.f32 %v34, %v96
  %v99 = vadd.f32 %v89, %v94
  %v101 = vrot.slane %v99, 6
  %v103 = vadd.f32 %v98, %v101
  %v104 = vxor.u32 %v103, 2147483648
  %v105 = vmul.f32 %v104, 1.442695
  %v106 = vpow.pop %v105
  %v107 = vadd.f32 %v106, 1.0
  %v108 = vrcp.pop %v107
  %v109 = vmul.f32 1.0, %v108
  %v110 = vmul.f32 %v109, 2.0
  %v111 = vsub.f32 %v110, 1.0
  %v113 = vrot.slane %v72, 6
  %v115 = vmul.f32 %v109, %v113
  %117 = vrot.lane.b32.xlu0 %v111, 122
  %v118 = vpop.permute.xlu0 %117
  %v120 = vmul.f32 %v109, %v118
  %122 = vrot.lane.b32.xlu0 %v120, 3
  %v123 = vpop.permute.xlu0 %122
  %v125 = vadd.f32 %v115, %v123
  %v126 = vtanh.pop %v125
  %128 = vrot.lane.b32.xlu0 %v126, 6
  %v129 = vpop.permute.xlu0 %128
  %v131 = vmul.f32 %v109, %v129
  %133 = vset.pattern.permute.xlu0 9
  %134 = vperm.xlu0 %133, %v131
  %v135 = vpop.permute.xlu0 %134
  %v137 = vmul.f32 %v135, %v39
  %138 = vset.pattern.permute.xlu0 10
  %139 = vperm.xlu0 %138, %v131
  %v140 = vpop.permute.xlu0 %139
  %v142 = vmul.f32 %v140, %v43
  %143 = vset.pattern.permute.xlu0 11
  %144 = vperm.xlu0 %143, %v131
  %v145 = vpop.permute.xlu0 %144
  %v147 = vmul.f32 %v145, %v47
  %v149 = vrot.slane %v137, 6
  %v151 = vadd.f32 %v34, %v149
  %v152 = vadd.f32 %v142, %v147
  %v154 = vrot.slane %v152, 6
  %v156 = vadd.f32 %v151, %v154
  %v157 = vxor.u32 %v156, 2147483648
  %v158 = vmul.f32 %v157, 1.442695
  %v159 = vpow.pop %v158
  %v160 = vadd.f32 %v159, 1.0
  %v161 = vrcp.pop %v160
  %v162 = vmul.f32 1.0, %v161
  %v163 = vmul.f32 %v162, 2.0
  %v164 = vsub.f32 %v163, 1.0
  %v166 = vrot.slane %v125, 6
  %v168 = vmul.f32 %v162, %v166
  %170 = vrot.lane.b32.xlu0 %v164, 122
  %v171 = vpop.permute.xlu0 %170
  %v173 = vmul.f32 %v162, %v171
  %175 = vrot.lane.b32.xlu0 %v173, 3
  %v176 = vpop.permute.xlu0 %175
  %v178 = vadd.f32 %v168, %v176
  %v179 = vtanh.pop %v178
  %181 = vrot.lane.b32.xlu0 %v179, 6
  %v182 = vpop.permute.xlu0 %181
  %v184 = vmul.f32 %v162, %v182
  %186 = vset.pattern.permute.xlu0 9
  %187 = vperm.xlu0 %186, %v184
  %v188 = vpop.permute.xlu0 %187
  %v190 = vmul.f32 %v188, %v39
  %191 = vset.pattern.permute.xlu0 10
  %192 = vperm.xlu0 %191, %v184
  %v193 = vpop.permute.xlu0 %192
  %v195 = vmul.f32 %v193, %v43
  %196 = vset.pattern.permute.xlu0 11
  %197 = vperm.xlu0 %196, %v184
  %v198 = vpop.permute.xlu0 %197
  %v200 = vmul.f32 %v198, %v47
  %v202 = vrot.slane %v190, 6
  %v204 = vadd.f32 %v34, %v202
  %v205 = vadd.f32 %v195, %v200
  %v207 = vrot.slane %v205, 6
  %v209 = vadd.f32 %v204, %v207
  %v210 = vxor.u32 %v209, 2147483648
  %v211 = vmul.f32 %v210, 1.442695
  %v212 = vpow.pop %v211
  %v213 = vadd.f32 %v212, 1.0
  %v214 = vrcp.pop %v213
  %v215 = vmul.f32 1.0, %v214
  %v216 = vmul.f32 %v215, 2.0
  %v217 = vsub.f32 %v216, 1.0
  %v219 = vrot.slane %v178, 6
  %v221 = vmul.f32 %v215, %v219
  %223 = vrot.lane.b32.xlu0 %v217, 122
  %v224 = vpop.permute.xlu0 %223
  %v226 = vmul.f32 %v215, %v224
  %228 = vrot.lane.b32.xlu0 %v226, 3
  %v229 = vpop.permute.xlu0 %228
  %v231 = vadd.f32 %v221, %v229
  %v232 = vtanh.pop %v231
  %234 = vrot.lane.b32.xlu0 %v232, 6
  %v235 = vpop.permute.xlu0 %234
  %v237 = vmul.f32 %v215, %v235
  %239 = vset.pattern.permute.xlu0 9
  %240 = vperm.xlu0 %239, %v237
  %v241 = vpop.permute.xlu0 %240
  %v243 = vmul.f32 %v241, %v39
  %244 = vset.pattern.permute.xlu0 10
  %245 = vperm.xlu0 %244, %v237
  %v246 = vpop.permute.xlu0 %245
  %v248 = vmul.f32 %v246, %v43
  %249 = vset.pattern.permute.xlu0 11
  %250 = vperm.xlu0 %249, %v237
  %v251 = vpop.permute.xlu0 %250
  %v253 = vmul.f32 %v251, %v47
  %v255 = vrot.slane %v243, 6
  %v257 = vadd.f32 %v35, %v255
  %v258 = vadd.f32 %v248, %v253
  %v260 = vrot.slane %v258, 6
  %v262 = vadd.f32 %v257, %v260
  %v263 = vxor.u32 %v262, 2147483648
  %v264 = vmul.f32 %v263, 1.442695
  %v265 = vpow.pop %v264
  %v266 = vadd.f32 %v265, 1.0
  %v267 = vrcp.pop %v266
  %v268 = vmul.f32 1.0, %v267
  %v269 = vmul.f32 %v268, 2.0
  %v270 = vsub.f32 %v269, 1.0
  %v272 = vrot.slane %v231, 6
  %v274 = vmul.f32 %v268, %v272
  %276 = vrot.lane.b32.xlu0 %v270, 122
  %v277 = vpop.permute.xlu0 %276
  %v279 = vmul.f32 %v268, %v277
  %281 = vrot.lane.b32.xlu0 %v279, 3
  %v282 = vpop.permute.xlu0 %281
  %v284 = vadd.f32 %v274, %v282
  %v285 = vtanh.pop %v284
  %287 = vrot.lane.b32.xlu0 %v285, 6
  %v288 = vpop.permute.xlu0 %287
  %v290 = vmul.f32 %v268, %v288
  %292 = vset.pattern.permute.xlu0 9
  %293 = vperm.xlu0 %292, %v290
  %v294 = vpop.permute.xlu0 %293
  %v296 = vmul.f32 %v294, %v39
  %297 = vset.pattern.permute.xlu0 10
  %298 = vperm.xlu0 %297, %v290
  %v299 = vpop.permute.xlu0 %298
  %v301 = vmul.f32 %v299, %v43
  %302 = vset.pattern.permute.xlu0 11
  %303 = vperm.xlu0 %302, %v290
  %v304 = vpop.permute.xlu0 %303
  %v306 = vmul.f32 %v304, %v47
  %v308 = vrot.slane %v296, 6
  %v310 = vadd.f32 %v35, %v308
  %v311 = vadd.f32 %v301, %v306
  %v313 = vrot.slane %v311, 6
  %v315 = vadd.f32 %v310, %v313
  %v316 = vxor.u32 %v315, 2147483648
  %v317 = vmul.f32 %v316, 1.442695
  %v318 = vpow.pop %v317
  %v319 = vadd.f32 %v318, 1.0
  %v320 = vrcp.pop %v319
  %v321 = vmul.f32 1.0, %v320
  %v322 = vmul.f32 %v321, 2.0
  %v323 = vsub.f32 %v322, 1.0
  %v325 = vrot.slane %v284, 6
  %v327 = vmul.f32 %v321, %v325
  %329 = vrot.lane.b32.xlu0 %v323, 122
  %v330 = vpop.permute.xlu0 %329
  %v332 = vmul.f32 %v321, %v330
  %334 = vrot.lane.b32.xlu0 %v332, 3
  %v335 = vpop.permute.xlu0 %334
  %v337 = vadd.f32 %v327, %v335
  %v338 = vtanh.pop %v337
  %340 = vrot.lane.b32.xlu0 %v338, 6
  %v341 = vpop.permute.xlu0 %340
  %v343 = vmul.f32 %v321, %v341
  %345 = vset.pattern.permute.xlu0 9
  %346 = vperm.xlu0 %345, %v343
  %v347 = vpop.permute.xlu0 %346
  %v349 = vmul.f32 %v347, %v39
  %350 = vset.pattern.permute.xlu0 10
  %351 = vperm.xlu0 %350, %v343
  %v352 = vpop.permute.xlu0 %351
  %v354 = vmul.f32 %v352, %v43
  %355 = vset.pattern.permute.xlu0 11
  %356 = vperm.xlu0 %355, %v343
  %v357 = vpop.permute.xlu0 %356
  %v359 = vmul.f32 %v357, %v47
  %v361 = vrot.slane %v349, 6
  %v363 = vadd.f32 %v35, %v361
  %v364 = vadd.f32 %v354, %v359
  %v366 = vrot.slane %v364, 6
  %v368 = vadd.f32 %v363, %v366
  %v369 = vxor.u32 %v368, 2147483648
  %v370 = vmul.f32 %v369, 1.442695
  %v371 = vpow.pop %v370
  %v372 = vadd.f32 %v371, 1.0
  %v373 = vrcp.pop %v372
  %v374 = vmul.f32 1.0, %v373
  %v375 = vmul.f32 %v374, 2.0
  %v376 = vsub.f32 %v375, 1.0
  %v378 = vrot.slane %v337, 6
  %v380 = vmul.f32 %v374, %v378
  %382 = vrot.lane.b32.xlu0 %v376, 122
  %v383 = vpop.permute.xlu0 %382
  %v385 = vmul.f32 %v374, %v383
  %387 = vrot.lane.b32.xlu0 %v385, 3
  %v388 = vpop.permute.xlu0 %387
  %v390 = vadd.f32 %v380, %v388
  %v391 = vtanh.pop %v390
  %393 = vrot.lane.b32.xlu0 %v391, 6
  %v394 = vpop.permute.xlu0 %393
  %v396 = vmul.f32 %v374, %v394
  %398 = vset.pattern.permute.xlu0 9
  %399 = vperm.xlu0 %398, %v396
  %v400 = vpop.permute.xlu0 %399
  %v402 = vmul.f32 %v400, %v39
  %403 = vset.pattern.permute.xlu0 10
  %404 = vperm.xlu0 %403, %v396
  %v405 = vpop.permute.xlu0 %404
  %v407 = vmul.f32 %v405, %v43
  %408 = vset.pattern.permute.xlu0 11
  %409 = vperm.xlu0 %408, %v396
  %v410 = vpop.permute.xlu0 %409
  %v412 = vmul.f32 %v410, %v47
  %v414 = vrot.slane %v402, 6
  %v416 = vadd.f32 %v35, %v414
  %v417 = vadd.f32 %v407, %v412
  %v419 = vrot.slane %v417, 6
  %v421 = vadd.f32 %v416, %v419
  %v422 = vxor.u32 %v421, 2147483648
  %v423 = vmul.f32 %v422, 1.442695
  %v424 = vpow.pop %v423
  %v425 = vadd.f32 %v424, 1.0
  %v426 = vrcp.pop %v425
  %v427 = vmul.f32 1.0, %v426
  %v428 = vmul.f32 %v427, 2.0
  %v429 = vsub.f32 %v428, 1.0
  %v431 = vrot.slane %v390, 6
  %v433 = vmul.f32 %v427, %v431
  %435 = vrot.lane.b32.xlu0 %v429, 122
  %v436 = vpop.permute.xlu0 %435
  %v438 = vmul.f32 %v427, %v436
  %440 = vrot.lane.b32.xlu0 %v438, 3
  %v441 = vpop.permute.xlu0 %440
  %v443 = vadd.f32 %v433, %v441
  %v444 = vtanh.pop %v443
  %446 = vrot.lane.b32.xlu0 %v444, 6
  %v447 = vpop.permute.xlu0 %446
  %v449 = vmul.f32 %v427, %v447
  %v450 = vlaneseq
  %v451 = vshrl.u32 %v450, 7
  %v452 = vsub.s32 5, %v451
  %v453 = vrot.slane %v11, %v452
  %455 = vrot.lane.b32.xlu0 %v453, 9
  %v456 = vpop.permute.xlu0 %455
  %v458 = vmul.f32 %v449, %v456
  %v459 = vlaneseq
  %v460 = vshrl.u32 %v459, 7
  %v461 = vsub.s32 6, %v460
  %v462 = vrot.slane %v11, %v461
  %464 = vrot.lane.b32.xlu0 %v462, 9
  %v465 = vpop.permute.xlu0 %464
  %v467 = vadd.f32 %v458, %v465
  %469 = vrot.lane.b32.xlu0 %v458, 127
  %v470 = vpop.permute.xlu0 %469
  %v472 = vadd.f32 %v467, %v470
  %473 = vrot.lane.b32.xlu0 %v458, 126
  %v474 = vpop.permute.xlu0 %473
  %v476 = vadd.f32 %v472, %v474
  %478 = vrot.lane.b32.xlu0 %v476, 119
  %v479 = vpop.permute.xlu0 %478
  %vm481 = vcmask 7174
  %482 = vst.msk [vmem:[%s2 - $0x6] sm:$0xc0] %vm481, %v479
  // Predicated region
  $region10: #{tpu_custom_call.1} parent=0 // pred_check
    _
  $region11: #{tpu_custom_call.1} parent=0 // pred_check_branch
    %484 = sbr.rel (0) target = $region13
  $region12: #{tpu_custom_call.1} parent=0 // pred_region
    _
  $region13: #{tpu_custom_call.1} parent=0 // pred_fallthru
    _
  // Predicated region
  $region14: #{tpu_custom_call.1} parent=0 // pred_check
    _
  $region15: #{tpu_custom_call.1} parent=0 // pred_check_branch
    %486 = sbr.rel (0) target = $region17
  $region16: #{tpu_custom_call.1} parent=0 // pred_region
    _
  $region17: #{tpu_custom_call.1} parent=0 // pred_fallthru
    _

</llo_original>
